<compile_context>
chip_gen: v5e
topology: v5e:2x2
jax: 0.10.0
libtpu: 0.0.40
codegen_flags: <defaults>
</compile_context>

<pallas_src>
import math

import jax
import jax.numpy as jnp
from jax.experimental import pallas as pl
from jax.experimental.pallas import tpu as pltpu


def _round_up(x: int, m: int) -> int:
    return (x + m - 1) // m * m


# Minimum sublane multiple by compute-dtype itemsize (f32 -> 8, bf16 -> 16, int8/fp8 -> 32).
_SUBLANE = {4: 8, 2: 16, 1: 32}


def _classifier_kernel_single_k(x_ref, wt_ref, b_ref, o_ref):
    # Whole K fits in one tile: no accumulator scratch, bias added once, cast out.
    acc = jnp.dot(x_ref[...], wt_ref[...], preferred_element_type=jnp.float32)
    o_ref[...] = (acc + b_ref[...].astype(jnp.float32)).astype(o_ref.dtype)


def _classifier_kernel_multi_k(x_ref, wt_ref, b_ref, o_ref, acc_ref):
    # x_ref:   (tm, tk)  tokens x features tile (compute dtype, e.g. bf16)
    # wt_ref:  (tk, tn)  features x classes tile (pre-transposed wrapper-side)
    # b_ref:   (1,  tn)  bias tile
    # o_ref:   (tm, tn)  output tile
    # acc_ref: (tm, tn)  f32 accumulator, resident across the K axis
    k = pl.program_id(2)

    @pl.when(k == 0)
    def _():
        # Fold the bias into the accumulator init: removes the final full-tile add.
        acc_ref[...] = jnp.broadcast_to(
            b_ref[...].astype(jnp.float32), acc_ref.shape
        )

    acc_ref[...] += jnp.dot(
        x_ref[...], wt_ref[...], preferred_element_type=jnp.float32
    )

    @pl.when(k == pl.num_programs(2) - 1)
    def _():
        o_ref[...] = acc_ref[...].astype(o_ref.dtype)


def classifier_2d_forward(
    x,
    weight,
    bias=None,
    *,
    compute_dtype=jnp.bfloat16,
    tm=None,
    tn=None,
    tk=None,
):
    """x: [..., in_features]; weight: [num_classes, in_features]; bias: [num_classes] or None."""
    *lead, K = x.shape
    N, Kw = weight.shape
    assert Kw == K, f"weight in_features {Kw} != input in_features {K}"
    out_dtype = x.dtype
    if bias is None:
        bias = jnp.zeros((N,), dtype=jnp.float32)

    M = int(math.prod(lead)) if lead else 1

    ci = jnp.dtype(compute_dtype).itemsize
    oi = jnp.dtype(out_dtype).itemsize
    bi = jnp.dtype(bias.dtype).itemsize
    sub = _SUBLANE.get(ci, 8)

    # Minimal-alignment pads first (sublane for M, 128 lanes for K/N).
    Mp0 = _round_up(M, sub)
    Np0 = _round_up(N, 128)
    Kp0 = _round_up(K, 128)

    # Tile defaults: big output tiles for HBM reuse, K collapsed when it fits.
    tm = tm or min(512, Mp0)
    tn = tn or min(1024, Np0)
    tk = tk or min(2048, Kp0)
    tm = _round_up(tm, sub)
    tn = _round_up(tn, 128)
    tk = _round_up(tk, 128)

    Mp = _round_up(Mp0, tm)
    Np = _round_up(Np0, tn)
    Kp = _round_up(Kp0, tk)

    # Guarantee >=2 parallel blocks when possible so dual-TC chips (v7x) use
    # both TensorCores; shrink tn (cheaper than re-streaming the weight).
    while (Mp // tm) * (Np // tn) < 2 and tn > 128:
        tn = max(128, (tn // 2) // 128 * 128)
        Np = _round_up(Np0, tn)

    gm, gn, gk = Mp // tm, Np // tn, Kp // tk
    grid = (gm, gn, gk)

    # Cast to the MXU compute dtype wrapper-side (halves streamed bytes for f32
    # inputs), transpose the weight ONCE to [K, N], then zero-pad.
    x2d = x.reshape(M, K).astype(compute_dtype)
    if (Mp, Kp) != (M, K):
        x2d = jnp.pad(x2d, ((0, Mp - M), (0, Kp - K)))  # zeros: no effect on dot
    wt = weight.T.astype(compute_dtype)  # [K, N]; one HBM transpose amortized over all M tiles
    if (Kp, Np) != (K, N):
        wt = jnp.pad(wt, ((0, Kp - K), (0, Np - N)))
    b2d = bias.reshape(1, N)
    if Np != N:
        b2d = jnp.pad(b2d, ((0, 0), (0, Np - N)))

    # Explicit VMEM budget: double-buffered streamed tiles + (optional) f32 acc.
    vmem_est = 2 * (tm * tk * ci + tk * tn * ci + tm * tn * oi + tn * bi)
    if gk > 1:
        vmem_est += tm * tn * 4
    vmem_limit = min(max(int(vmem_est * 1.5), 32 * 1024 * 1024), 48 * 1024 * 1024)

    # Actual streamed traffic: x re-read per N block, W re-read per M block.
    cost = pl.CostEstimate(
        flops=2 * Mp * Np * Kp,
        transcendentals=0,
        bytes_accessed=(
            Mp * Kp * ci * gn
            + Kp * Np * ci * gm
            + Np * bi
            + Mp * Np * oi
        ),
    )

    in_specs = [
        pl.BlockSpec((tm, tk), lambda i, j, k: (i, k)),  # activations
        pl.BlockSpec((tk, tn), lambda i, j, k: (k, j)),  # weight, already [K, N]
        pl.BlockSpec((1, tn), lambda i, j, k: (0, j)),   # bias
    ]
    out_spec = pl.BlockSpec((tm, tn), lambda i, j, k: (i, j))

    if gk == 1:
        kernel = _classifier_kernel_single_k
        scratch_shapes = []
    else:
        kernel = _classifier_kernel_multi_k
        scratch_shapes = [pltpu.VMEM((tm, tn), jnp.float32)]

    out2d = pl.pallas_call(
        kernel,
        out_shape=jax.ShapeDtypeStruct((Mp, Np), out_dtype),
        grid_spec=pltpu.PrefetchScalarGridSpec(
            num_scalar_prefetch=0,
            grid=grid,
            in_specs=in_specs,
            out_specs=out_spec,
            scratch_shapes=scratch_shapes,
        ),
        compiler_params=pltpu.CompilerParams(
            dimension_semantics=("parallel", "parallel", "arbitrary"),
            vmem_limit_bytes=vmem_limit,
        ),
        cost_estimate=cost,
    )(x2d, wt, b2d)

    out2d = out2d[:M, :N]
    return out2d.reshape(*lead, N)


def init_params(key, in_features, num_classes, dtype=jnp.float32):
    """Deterministic init matching the module's initializers.

    weight: kaiming_uniform_(a=sqrt(5)) over fan_in=in_features
            -> bound = 1/sqrt(fan_in)
    bias:   xavier_uniform_(a=1, scale=1) -> bound = sqrt(6 / (fan_in + fan_out))
    """
    kw, kb = jax.random.split(key)
    w_bound = 1.0 / math.sqrt(in_features)
    weight = jax.random.uniform(
        kw, (num_classes, in_features), dtype=dtype, minval=-w_bound, maxval=w_bound
    )
    b_bound = math.sqrt(6.0 / (in_features + num_classes))
    bias = jax.random.uniform(
        kb, (num_classes,), dtype=dtype, minval=-b_bound, maxval=b_bound
    )
    return weight, bias


def _reference(x, w, b):
    """Reference matching the kernel's compute path (bf16 operands, f32 accum)."""
    *lead, K = x.shape
    N = w.shape[0]
    xb = x.reshape(-1, K).astype(jnp.bfloat16)
    wb = w.T.astype(jnp.bfloat16)
    out = jnp.dot(xb, wb, preferred_element_type=jnp.float32) + b.astype(jnp.float32)
    return out.astype(x.dtype).reshape(*lead, N)


if __name__ == "__main__":
    key = jax.random.PRNGKey(0)
    k_x, k_p, k_x2, k_p2 = jax.random.split(key, 4)

    # --- small case (module-scale demo shapes) -----------------------------
    batch, seq, in_features, num_classes = 2, 8, 32, 16
    x = jax.random.normal(k_x, (batch, seq, in_features), dtype=jnp.float32)
    weight, bias = init_params(k_p, in_features, num_classes)

    out = jax.block_until_ready(classifier_2d_forward(x, weight, bias))
    ref = _reference(x, weight, bias)
    assert out.shape == (batch, seq, num_classes)
    assert jnp.allclose(out, ref, atol=1e-4, rtol=1e-4), "small case mismatch"

    # --- larger case: multi-block N (parallel axes), K collapsed to 1 step --
    B2, S2, K2, N2 = 2, 256, 1024, 1000
    x2 = jax.random.normal(k_x2, (B2, S2, K2), dtype=jnp.float32)
    w2, b2 = init_params(k_p2, K2, N2)

    out2 = jax.block_until_ready(classifier_2d_forward(x2, w2, b2))
    ref2 = _reference(x2, w2, b2)
    assert out2.shape == (B2, S2, N2)
    rel_err = jnp.max(jnp.abs(out2 - ref2)) / (jnp.max(jnp.abs(ref2)) + 1e-6)
    assert rel_err < 1e-2, f"large case mismatch, rel_err={rel_err}"

    # --- same problem, forced multi-K path (exercises the f32 accumulator) --
    out3 = jax.block_until_ready(classifier_2d_forward(x2, w2, b2, tk=256))
    rel_err3 = jnp.max(jnp.abs(out3 - ref2)) / (jnp.max(jnp.abs(ref2)) + 1e-6)
    assert rel_err3 < 1e-2, f"multi-K case mismatch, rel_err={rel_err3}"

    print("KERNEL_OK")
</pallas_src>

<mosaic_0001>
module attributes {stable_mosaic.version = 11 : i64} {
  func.func @_classifier_kernel_single_k(%arg0: i32, %arg1: i32, %arg2: i32, %arg3: memref<16x128xbf16, #tpu.memory_space<vmem>>, %arg4: memref<128x128xbf16, #tpu.memory_space<vmem>>, %arg5: memref<1x128xf32, #tpu.memory_space<vmem>>, %arg6: memref<16x128xf32, #tpu.memory_space<vmem>>) attributes {dimension_semantics = [#tpu.dimension_semantics<parallel>, #tpu.dimension_semantics<parallel>, #tpu.dimension_semantics<arbitrary>], iteration_bounds = array<i64: 1, 1, 1>, scalar_prefetch = 0 : i64, scratch_operands = 0 : i64, tpu.core_type = #tpu.core_type<tc>, window_params = [{transform_indices = @transform_0, window_bounds = array<i64: 16, 128>}, {transform_indices = @transform_1, window_bounds = array<i64: 128, 128>}, {transform_indices = @transform_2, window_bounds = array<i64: 1, 128>}, {transform_indices = @transform_3, window_bounds = array<i64: 16, 128>}]} {
    %c0 = arith.constant 0 : index
    %c0_0 = arith.constant 0 : index
    %0 = vector.load %arg3[%c0, %c0_0] : memref<16x128xbf16, #tpu.memory_space<vmem>>, vector<16x128xbf16>
    %c0_1 = arith.constant 0 : index
    %c0_2 = arith.constant 0 : index
    %1 = vector.load %arg4[%c0_1, %c0_2] : memref<128x128xbf16, #tpu.memory_space<vmem>>, vector<128x128xbf16>
    %cst = arith.constant dense<0.000000e+00> : vector<16x128xf32>
    %2 = tpu.matmul %0, %1, %cst {dimension_numbers = #tpu.dot_dimension_numbers<[1], [0], [0], [1], [0, 0, 1, 1], [], []>} : vector<16x128xbf16>, vector<128x128xbf16>, vector<16x128xf32> -> vector<16x128xf32>
    %c0_3 = arith.constant 0 : index
    %c0_4 = arith.constant 0 : index
    %3 = vector.load %arg5[%c0_3, %c0_4] : memref<1x128xf32, #tpu.memory_space<vmem>>, vector<1x128xf32>
    %4 = vector.broadcast %3 : vector<1x128xf32> to vector<16x128xf32>
    %5 = arith.addf %2, %4 : vector<16x128xf32>
    %c0_5 = arith.constant 0 : index
    %c0_6 = arith.constant 0 : index
    %6 = vector.load %arg6[%c0_5, %c0_6] : memref<16x128xf32, #tpu.memory_space<vmem>>, vector<16x128xf32>
    tpu.vector_store %arg6[%c0_5, %c0_6], %5 {strides = array<i32>} : memref<16x128xf32, #tpu.memory_space<vmem>>, vector<16x128xf32>,
    return
  }
  func.func @transform_0(%arg0: i32, %arg1: i32, %arg2: i32) -> (i32, i32) {
    %c0_i32 = arith.constant 0 : i32
    return %arg0, %arg2 : i32, i32
  }
  func.func @transform_1(%arg0: i32, %arg1: i32, %arg2: i32) -> (i32, i32) {
    %c0_i32 = arith.constant 0 : i32
    return %arg2, %arg1 : i32, i32
  }
  func.func @transform_2(%arg0: i32, %arg1: i32, %arg2: i32) -> (i32, i32) {
    %c0_i32 = arith.constant 0 : i32
    %c0_i32_0 = arith.constant 0 : i32
    return %c0_i32, %arg1 : i32, i32
  }
  func.func @transform_3(%arg0: i32, %arg1: i32, %arg2: i32) -> (i32, i32) {
    %c0_i32 = arith.constant 0 : i32
    return %arg0, %arg1 : i32, i32
  }
}

</mosaic_0001>

<llo_original>
// kernel: tpu_custom_call.1
$region0: #{tpu_custom_call.1}
  #allocation0 [shape = 'u32[]', space=smem, size = 0x4, offset = 0x4, fixed_abs, tag = 'smem constant byte address 0x4 - core index']
  #allocation1 [shape = 'u32[72,128]{1,0:T(1,128)}', space=vmem, size = 0x9000, scoped, tag = 'internal scratch']
  %s0 = inlined_call_operand.hbm [shape: bf16[16,128], index: 0, kind: input, shape index: {}]
  %s1 = inlined_call_operand.hbm [shape: bf16[128,128], index: 1, kind: input, shape index: {}]
  %s2 = inlined_call_operand.vmem [shape: f32[1,128], index: 2, kind: input, shape index: {}]
  %s3 = inlined_call_operand.hbm [shape: f32[16,128], index: 3, kind: output, shape index: {}]
  %s4 = sld [smem:[#allocation0]]
  $region30: #{tpu_custom_call.1} parent=0
    _
  %s6 = ssub.s32 1, %s4
  %s7 = scalar_select 0, %s6, %s4
  $region1: #{tpu_custom_call.1} parent=0
    #allocation2 [shape = 'u8[4096]{0}', space=vmem, size = 0x1000, scoped, tag = 'input window, operand 0, single buffered']
    #allocation3 [shape = 's32[1]{0}', space=sflag, size = 0x4, scoped, tag = 'scoped memory for tpu_custom_call.1']
    #allocation4 [shape = 's32[1]{0}', space=sflag, size = 0x4, scoped, tag = 'scoped memory for tpu_custom_call.1']
    #allocation5 [shape = 'u8[32768]{0}', space=vmem, size = 0x8000, scoped, tag = 'input window, operand 1, single buffered']
    #allocation6 [shape = 's32[1]{0}', space=sflag, size = 0x4, scoped, tag = 'scoped memory for tpu_custom_call.1']
    #allocation7 [shape = 'u8[8192]{0}', space=vmem, size = 0x2000, scoped, tag = 'output window, operand 0, single buffered']
    %8 = vsyncpa [#allocation3], 0
    %9 = vsyncpa [#allocation6], 0
    %10 = vsyncpa [#allocation4], 0
    // Predicated region
    $region2: #{tpu_custom_call.1} parent=1 // pred_check
      _
    $region3: #{tpu_custom_call.1} parent=1 // pred_check_branch
      %12 = sbr.rel (0) target = $region5
    $region4: #{tpu_custom_call.1} parent=1 // pred_region
      %14 = vsyncadd [#allocation3], 0
      %s15 = sshll.u32 %s0, 4
      %s16 = int_to_ptr.hbm [resolvable:$true] %s15
      %s17 = sshll.u32 [#allocation2], 4
      %s18 = int_to_ptr.vmem [resolvable:$true] %s17
      %23 = dma.hbm_to_vmem [thread:$0]  %s16, 128, %s18, [#allocation3], 64, 64, 4
    $region5: #{tpu_custom_call.1} parent=1 // pred_fallthru
      _
    // Predicated region
    $region6: #{tpu_custom_call.1} parent=1 // pred_check
      _
    $region7: #{tpu_custom_call.1} parent=1 // pred_check_branch
      %25 = sbr.rel (0) target = $region9
    $region8: #{tpu_custom_call.1} parent=1 // pred_region
      %27 = vsyncadd [#allocation6], 0
      %s28 = sshll.u32 %s1, 4
      %s29 = int_to_ptr.hbm [resolvable:$true] %s28
      %s30 = sshll.u32 [#allocation5], 4
      %s31 = int_to_ptr.vmem [resolvable:$true] %s30
      %36 = dma.hbm_to_vmem [thread:$0]  %s29, 1024, %s31, [#allocation6], 64, 64, 4
    $region9: #{tpu_custom_call.1} parent=1 // pred_fallthru
      _
    // Predicated region
    $region10: #{tpu_custom_call.1} parent=1 // pred_check
      _
    $region11: #{tpu_custom_call.1} parent=1 // pred_check_branch
      %38 = sbr.rel (0) target = $region13
    $region12: #{tpu_custom_call.1} parent=1 // pred_region
      _
    $region13: #{tpu_custom_call.1} parent=1 // pred_fallthru
      _
    // Predicated region
    $region14: #{tpu_custom_call.1} parent=1 // pred_check
      _
    $region15: #{tpu_custom_call.1} parent=1 // pred_check_branch
      %40 = sbr.rel (0) target = $region17
    $region16: #{tpu_custom_call.1} parent=1 // pred_region
      %42 = dma.done [#allocation3], 128
    $region17: #{tpu_custom_call.1} parent=1 // pred_fallthru
      _
    // Predicated region
    $region18: #{tpu_custom_call.1} parent=1 // pred_check
      _
    $region19: #{tpu_custom_call.1} parent=1 // pred_check_branch
      %44 = sbr.rel (0) target = $region21
    $region20: #{tpu_custom_call.1} parent=1 // pred_region
      %46 = dma.done [#allocation6], 1024
    $region21: #{tpu_custom_call.1} parent=1 // pred_fallthru
      _
    %v47 = vld [vmem:[#allocation2] sm:$0xf]
    %v48 = vld [vmem:[#allocation2 + $0x4] sm:$0xf]
    %v49 = vld [vmem:[#allocation5] sm:$0xf]
    %v50 = vld [vmem:[#allocation5 + $0x4] sm:$0xf]
    %v51 = vld [vmem:[#allocation5 + $0x8] sm:$0xf]
    %v52 = vld [vmem:[#allocation5 + $0xc] sm:$0xf]
    %v53 = vld [vmem:[#allocation5 + $0x10] sm:$0xf]
    %v54 = vld [vmem:[#allocation5 + $0x14] sm:$0xf]
    %v55 = vld [vmem:[#allocation5 + $0x18] sm:$0xf]
    %v56 = vld [vmem:[#allocation5 + $0x1c] sm:$0xf]
    %v57 = vld [vmem:[#allocation5 + $0x20] sm:$0xf]
    %v58 = vld [vmem:[#allocation5 + $0x24] sm:$0xf]
    %v59 = vld [vmem:[#allocation5 + $0x28] sm:$0xf]
    %v60 = vld [vmem:[#allocation5 + $0x2c] sm:$0xf]
    %v61 = vld [vmem:[#allocation5 + $0x30] sm:$0xf]
    %v62 = vld [vmem:[#allocation5 + $0x34] sm:$0xf]
    %v63 = vld [vmem:[#allocation5 + $0x38] sm:$0xf]
    %v64 = vld [vmem:[#allocation5 + $0x3c] sm:$0xf]
    %v65 = vld [vmem:[%s2] sm:$0x1]
    %v67 = vperm.slane %v65, 0
    %v71 = vunpack.c.l.b16 %v47
    %v72 = vunpack.c.l.b16 %v48
    %v73 = vpack.c.b16 %v72, %v71
    %v91 = vunpack.c.l.b16 %v49
    %v92 = vunpack.c.l.b16 %v50
    %v93 = vunpack.c.l.b16 %v51
    %v94 = vunpack.c.l.b16 %v52
    %v95 = vunpack.c.l.b16 %v53
    %v96 = vunpack.c.l.b16 %v54
    %v97 = vunpack.c.l.b16 %v55
    %v98 = vunpack.c.l.b16 %v56
    %v99 = vunpack.c.l.b16 %v57
    %v100 = vunpack.c.l.b16 %v58
    %v101 = vunpack.c.l.b16 %v59
    %v102 = vunpack.c.l.b16 %v60
    %v103 = vunpack.c.l.b16 %v61
    %v104 = vunpack.c.l.b16 %v62
    %v105 = vunpack.c.l.b16 %v63
    %v106 = vunpack.c.l.b16 %v64
    %v107 = vpack.c.b16 %v92, %v91
    %v108 = vpack.c.b16 %v94, %v93
    %v109 = vpack.c.b16 %v96, %v95
    %v110 = vpack.c.b16 %v98, %v97
    %v111 = vpack.c.b16 %v100, %v99
    %v112 = vpack.c.b16 %v102, %v101
    %v113 = vpack.c.b16 %v104, %v103
    %v114 = vpack.c.b16 %v106, %v105
    %123 = vmatpush.bf16.msra.mxu0 %v114
    %124 = vmatpush.bf16.msra.mxu0 %v113
    %125 = vmatpush.bf16.msra.mxu0 %v112
    %126 = vmatpush.bf16.msra.mxu0 %v111
    %127 = vmatpush.bf16.msra.mxu0 %v110
    %128 = vmatpush.bf16.msra.mxu0 %v109
    %129 = vmatpush.bf16.msra.mxu0 %v108
    %130 = vmatpush.bf16.msra.mxu0 %v107
    %131 = vmatmul.bf16.gmra.mxu0 %v73
    %v132 = vpop.f32.mrf.mxu0
    %v133 = vadd.f32 %v67, %v132
    %v134 = vpop.f32.mrf.mxu0
    %v135 = vadd.f32 %v67, %v134
    %136 = vdwg.mxu0
    %137 = vst [vmem:[#allocation7] sm:$0xff] %v133
    %138 = vst [vmem:[#allocation7 + $0x8] sm:$0xff] %v135
    // Predicated region
    $region22: #{tpu_custom_call.1} parent=1 // pred_check
      _
    $region23: #{tpu_custom_call.1} parent=1 // pred_check_branch
      %140 = sbr.rel (0) target = $region25
    $region24: #{tpu_custom_call.1} parent=1 // pred_region
      %142 = vsyncadd [#allocation4], 0
      %s143 = sshll.u32 [#allocation7], 4
      %s144 = int_to_ptr.vmem [resolvable:$true] %s143
      %s145 = sshll.u32 %s3, 4
      %s146 = int_to_ptr.hbm [resolvable:$true] %s145
      %151 = dma.vmem_to_hbm [thread:$0]  %s144, 256, %s146, [#allocation4], 128, 128, 8
    $region25: #{tpu_custom_call.1} parent=1 // pred_fallthru
      _
    // Predicated region
    $region26: #{tpu_custom_call.1} parent=1 // pred_check
      _
    $region27: #{tpu_custom_call.1} parent=1 // pred_check_branch
      %153 = sbr.rel (0) target = $region29
    $region28: #{tpu_custom_call.1} parent=1 // pred_region
      %155 = dma.done [#allocation4], 256
    $region29: #{tpu_custom_call.1} parent=1 // pred_fallthru
      _
    %156 = vsyncpa [#allocation3], 1
    %157 = vsyncpa [#allocation6], 1
    %158 = vsyncpa [#allocation4], 1

</llo_original>
